<compile_context>
chip_gen: v5e
topology: v5e:2x2
jax: 0.10.0
libtpu: 0.0.40
codegen_flags: <defaults>
</compile_context>

<pallas_src>
import functools
import math

import jax
import jax.numpy as jnp
from jax.experimental import pallas as pl
from jax.experimental.pallas import tpu as pltpu

KGE_SIZE = 160
NOISE_SIZE = KGE_SIZE
IN_DIM = NOISE_SIZE + KGE_SIZE          # 320
PATTERN_NUM = 32
PATTERN_LENGTH = 168
HOURS = 24
REPS = PATTERN_LENGTH // HOURS          # 7
LN_EPS = 1e-5
# Tile sized for the smallest VMEM (v7x 64 MiB, 32 MiB scoped default):
# 2 bufs x 1024 rows x (320+24+168) x 4 B ~= 4 MiB  -> safe on v5e/v6e/v7x.
TB_MAX = 1024


def _round_up(n, m):
    return ((n + m - 1) // m) * m


def _layer_norm(x, gamma, beta):
    mu = jnp.mean(x, axis=-1, keepdims=True)
    var = jnp.mean((x - mu) ** 2, axis=-1, keepdims=True)
    return (x - mu) * jax.lax.rsqrt(var + LN_EPS) * gamma + beta


def generator_kernel(x_ref, wt_ref, p1_ref, pt_ref, p2_ref, hours_ref, o_ref):
    # Packed per-feature params:
    #   p1 = [bias; ln1_gamma; ln1_beta]         (3, 32)
    #   pt = [dwr_patterns(32); repeat-matrix T(24)]   (56, 168)
    #   p2 = [ln2_gamma; ln2_beta]               (2, 168)
    b = p1_ref[0:1, :]
    g1 = p1_ref[1:2, :]
    b1 = p1_ref[2:3, :]
    g2 = p2_ref[0:1, :]
    b2 = p2_ref[1:2, :]
    patterns = pt_ref[0:PATTERN_NUM, :]                         # (32, 168)
    rep_t = pt_ref[PATTERN_NUM:PATTERN_NUM + HOURS, :]          # (24, 168)

    x = x_ref[...]                                              # (TB, 320)
    # linear_4dw (MXU) + bias
    h = jnp.dot(x, wt_ref[...], preferred_element_type=jnp.float32) + b
    # LayerNorm(pattern_num)
    hn = _layer_norm(h, g1, b1)                                 # (TB, 32)
    # softmax over dim=1 (last dim); reciprocal on the EUP slot.
    m = jnp.max(hn, axis=-1, keepdims=True)
    e = jnp.exp(hn - m)
    s = e * pl.reciprocal(jnp.sum(e, axis=-1, keepdims=True), approx=True)
    # s @ dwr_patterns (MXU), then LayerNorm(pattern_length)
    r = jnp.dot(s, patterns, preferred_element_type=jnp.float32)   # (TB, 168)
    rn = _layer_norm(r, g2, b2)
    # + hours_in_day.repeat(1, 7): one-hot selection matmul on the MXU,
    # exact and avoids cross-lane tiling work.
    ht = jnp.dot(hours_ref[...], rep_t, preferred_element_type=jnp.float32)
    y = rn + ht
    # exact (erf-based) GELU, matching torch.nn.GELU(approximate='none')
    o_ref[...] = 0.5 * y * (1.0 + jax.lax.erf(y * (1.0 / math.sqrt(2.0))))


@functools.partial(jax.jit, static_argnames=("tb_max",))
def generator_forward(x, hours_in_day, params, tb_max=TB_MAX):
    """x: (B, 320) f32, hours_in_day: (B, 24) f32 -> (B, 168) f32."""
    B = x.shape[0]
    assert x.shape == (B, IN_DIM)
    assert hours_in_day.shape == (B, HOURS)

    TB = min(tb_max, _round_up(B, 8))        # sublane-aligned batch tile
    Bp = _round_up(B, TB)

    x = x.astype(jnp.float32)
    hours = hours_in_day.astype(jnp.float32)
    if Bp != B:
        x = jnp.pad(x, ((0, Bp - B), (0, 0)))
        hours = jnp.pad(hours, ((0, Bp - B), (0, 0)))

    wt = params["w"].T.astype(jnp.float32)                                  # (320, 32)
    p1 = jnp.stack([params["b"], params["g1"], params["b1"]]).astype(jnp.float32)  # (3, 32)
    # 0/1 repeat matrix T: T[h, j] = 1 iff j % 24 == h   (hours @ T == tile(hours, 7))
    rep_t = (jnp.arange(PATTERN_LENGTH)[None, :] % HOURS
             == jnp.arange(HOURS)[:, None]).astype(jnp.float32)             # (24, 168)
    pt = jnp.concatenate(
        [params["patterns"].astype(jnp.float32), rep_t], axis=0)            # (56, 168)
    p2 = jnp.stack([params["g2"], params["b2"]]).astype(jnp.float32)        # (2, 168)

    out = pl.pallas_call(
        generator_kernel,
        out_shape=jax.ShapeDtypeStruct((Bp, PATTERN_LENGTH), jnp.float32),
        grid=(Bp // TB,),
        in_specs=[
            pl.BlockSpec((TB, IN_DIM), lambda i: (i, 0)),                   # x (batch-tiled)
            pl.BlockSpec((IN_DIM, PATTERN_NUM), lambda i: (0, 0)),          # W^T (resident)
            pl.BlockSpec((3, PATTERN_NUM), lambda i: (0, 0)),               # b/g1/b1 (resident)
            pl.BlockSpec((PATTERN_NUM + HOURS, PATTERN_LENGTH),
                         lambda i: (0, 0)),                                 # [patterns; T] (resident)
            pl.BlockSpec((2, PATTERN_LENGTH), lambda i: (0, 0)),            # g2/b2 (resident)
            pl.BlockSpec((TB, HOURS), lambda i: (i, 0)),                    # hours (batch-tiled)
        ],
        out_specs=pl.BlockSpec((TB, PATTERN_LENGTH), lambda i: (i, 0)),
        compiler_params=pltpu.CompilerParams(
            dimension_semantics=("parallel",)),   # megacore-shard batch tiles
    )(x, wt, p1, pt, p2, hours)
    return out[:B]


def generator_reference(x, hours_in_day, params):
    """Pure-JAX reference of the PyTorch forward."""
    h = x @ params["w"].T + params["b"]
    hn = _layer_norm(h, params["g1"], params["b1"])
    s = jax.nn.softmax(hn, axis=1)
    r = s @ params["patterns"]
    rn = _layer_norm(r, params["g2"], params["b2"])
    y = rn + jnp.tile(hours_in_day, (1, REPS))
    return 0.5 * y * (1.0 + jax.lax.erf(y * (1.0 / math.sqrt(2.0))))


def _orthogonal(key, rows, cols):
    """Deterministic semi-orthogonal init, like nn.init.orthogonal_."""
    a = jax.random.normal(key, (max(rows, cols), min(rows, cols)),
                          dtype=jnp.float32)
    q, r = jnp.linalg.qr(a)
    q = q * jnp.sign(jnp.diagonal(r))[None, :]
    if rows < cols:
        q = q.T
    return q[:rows, :cols]


def make_params(key):
    k_w, k_b, k_p = jax.random.split(key, 3)
    w = _orthogonal(k_w, PATTERN_NUM, IN_DIM)                   # (32, 320)
    bound = 1.0 / math.sqrt(IN_DIM)
    b = jax.random.uniform(k_b, (PATTERN_NUM,), jnp.float32, -bound, bound)
    patterns = _orthogonal(k_p, PATTERN_NUM, PATTERN_LENGTH)    # (32, 168)
    return {
        "w": w,
        "b": b,
        "g1": jnp.ones((PATTERN_NUM,), jnp.float32),
        "b1": jnp.zeros((PATTERN_NUM,), jnp.float32),
        "patterns": patterns,
        "g2": jnp.ones((PATTERN_LENGTH,), jnp.float32),
        "b2": jnp.zeros((PATTERN_LENGTH,), jnp.float32),
    }


if __name__ == "__main__":
    key = jax.random.PRNGKey(0)
    k_params, k_x, k_h = jax.random.split(key, 3)

    B = 2
    params = make_params(k_params)
    x = jax.random.normal(k_x, (B, IN_DIM), dtype=jnp.float32)            # (2, 320)
    hours_in_day = jax.random.normal(k_h, (B, HOURS), dtype=jnp.float32)  # (2, 24)

    out = generator_forward(x, hours_in_day, params)
    out = jax.block_until_ready(out)
    ref = generator_reference(x, hours_in_day, params)

    assert out.shape == (B, PATTERN_LENGTH)
    assert bool(jnp.all(jnp.isfinite(out)))
    assert bool(jnp.allclose(out, ref, atol=5e-2, rtol=5e-2))
    print("KERNEL_OK")
</pallas_src>

<mosaic_0001>
module attributes {stable_mosaic.version = 11 : i64} {
  func.func @generator_kernel(%arg0: i32, %arg1: memref<8x320xf32, #tpu.memory_space<vmem>>, %arg2: memref<320x32xf32, #tpu.memory_space<vmem>>, %arg3: memref<3x32xf32, #tpu.memory_space<vmem>>, %arg4: memref<56x168xf32, #tpu.memory_space<vmem>>, %arg5: memref<2x168xf32, #tpu.memory_space<vmem>>, %arg6: memref<8x24xf32, #tpu.memory_space<vmem>>, %arg7: memref<8x168xf32, #tpu.memory_space<vmem>>) attributes {dimension_semantics = [#tpu.dimension_semantics<parallel>], iteration_bounds = array<i64: 1>, scalar_prefetch = 0 : i64, scratch_operands = 0 : i64, tpu.core_type = #tpu.core_type<tc>, window_params = [{transform_indices = @transform_0, window_bounds = array<i64: 8, 320>}, {pipeline_mode = #tpu.pipeline_mode<synchronous>, transform_indices = @transform_1, window_bounds = array<i64: 320, 32>}, {pipeline_mode = #tpu.pipeline_mode<synchronous>, transform_indices = @transform_2, window_bounds = array<i64: 3, 32>}, {pipeline_mode = #tpu.pipeline_mode<synchronous>, transform_indices = @transform_3, window_bounds = array<i64: 56, 168>}, {pipeline_mode = #tpu.pipeline_mode<synchronous>, transform_indices = @transform_4, window_bounds = array<i64: 2, 168>}, {transform_indices = @transform_5, window_bounds = array<i64: 8, 24>}, {transform_indices = @transform_6, window_bounds = array<i64: 8, 168>}]} {
    %c0 = arith.constant 0 : index
    %c0_0 = arith.constant 0 : index
    %0 = vector.load %arg3[%c0, %c0_0] : memref<3x32xf32, #tpu.memory_space<vmem>>, vector<1x32xf32>
    %c1 = arith.constant 1 : index
    %c0_1 = arith.constant 0 : index
    %1 = vector.load %arg3[%c1, %c0_1] : memref<3x32xf32, #tpu.memory_space<vmem>>, vector<1x32xf32>
    %c2 = arith.constant 2 : index
    %c0_2 = arith.constant 0 : index
    %2 = vector.load %arg3[%c2, %c0_2] : memref<3x32xf32, #tpu.memory_space<vmem>>, vector<1x32xf32>
    %c0_3 = arith.constant 0 : index
    %c0_4 = arith.constant 0 : index
    %3 = vector.load %arg5[%c0_3, %c0_4] : memref<2x168xf32, #tpu.memory_space<vmem>>, vector<1x168xf32>
    %c1_5 = arith.constant 1 : index
    %c0_6 = arith.constant 0 : index
    %4 = vector.load %arg5[%c1_5, %c0_6] : memref<2x168xf32, #tpu.memory_space<vmem>>, vector<1x168xf32>
    %c0_7 = arith.constant 0 : index
    %c0_8 = arith.constant 0 : index
    %5 = vector.load %arg4[%c0_7, %c0_8] : memref<56x168xf32, #tpu.memory_space<vmem>>, vector<32x168xf32>
    %c32 = arith.constant 32 : index
    %c0_9 = arith.constant 0 : index
    %6 = vector.load %arg4[%c32, %c0_9] : memref<56x168xf32, #tpu.memory_space<vmem>>, vector<24x168xf32>
    %c0_10 = arith.constant 0 : index
    %c0_11 = arith.constant 0 : index
    %7 = vector.load %arg1[%c0_10, %c0_11] : memref<8x320xf32, #tpu.memory_space<vmem>>, vector<8x320xf32>
    %c0_12 = arith.constant 0 : index
    %c0_13 = arith.constant 0 : index
    %8 = vector.load %arg2[%c0_12, %c0_13] : memref<320x32xf32, #tpu.memory_space<vmem>>, vector<320x32xf32>
    %cst = arith.constant dense<0.000000e+00> : vector<8x32xf32>
    %9 = tpu.matmul %7, %8, %cst {dimension_numbers = #tpu.dot_dimension_numbers<[1], [0], [0], [1], [0, 0, 1, 1], [], []>} : vector<8x320xf32>, vector<320x32xf32>, vector<8x32xf32> -> vector<8x32xf32>
    %10 = vector.broadcast %0 : vector<1x32xf32> to vector<8x32xf32>
    %11 = arith.addf %9, %10 : vector<8x32xf32>
    %cst_14 = arith.constant dense<0.000000e+00> : vector<8xf32>
    %12 = vector.multi_reduction <add>, %11, %cst_14 [1] : vector<8x32xf32> to vector<8xf32>
    %13 = vector.shape_cast %12 : vector<8xf32> to vector<8x1xf32>
    %cst_15 = arith.constant 3.200000e+01 : f32
    %14 = vector.broadcast %cst_15 : f32 to vector<8x1xf32>
    %15 = arith.divf %13, %14 : vector<8x1xf32>
    %16 = vector.broadcast %15 : vector<8x1xf32> to vector<8x32xf32>
    %17 = arith.subf %11, %16 : vector<8x32xf32>
    %18 = arith.mulf %17, %17 : vector<8x32xf32>
    %cst_16 = arith.constant dense<0.000000e+00> : vector<8xf32>
    %19 = vector.multi_reduction <add>, %18, %cst_16 [1] : vector<8x32xf32> to vector<8xf32>
    %20 = vector.shape_cast %19 : vector<8xf32> to vector<8x1xf32>
    %cst_17 = arith.constant 3.200000e+01 : f32
    %21 = vector.broadcast %cst_17 : f32 to vector<8x1xf32>
    %22 = arith.divf %20, %21 : vector<8x1xf32>
    %23 = vector.broadcast %15 : vector<8x1xf32> to vector<8x32xf32>
    %24 = arith.subf %11, %23 : vector<8x32xf32>
    %cst_18 = arith.constant 9.99999974E-6 : f32
    %25 = vector.broadcast %cst_18 : f32 to vector<8x1xf32>
    %26 = arith.addf %22, %25 : vector<8x1xf32>
    %27 = math.rsqrt %26 : vector<8x1xf32>
    %28 = vector.broadcast %27 : vector<8x1xf32> to vector<8x32xf32>
    %29 = arith.mulf %24, %28 : vector<8x32xf32>
    %30 = vector.broadcast %1 : vector<1x32xf32> to vector<8x32xf32>
    %31 = arith.mulf %29, %30 : vector<8x32xf32>
    %32 = vector.broadcast %2 : vector<1x32xf32> to vector<8x32xf32>
    %33 = arith.addf %31, %32 : vector<8x32xf32>
    %cst_19 = arith.constant dense<0xFF800000> : vector<8xf32>
    %34 = vector.multi_reduction <maximumf>, %33, %cst_19 [1] : vector<8x32xf32> to vector<8xf32>
    %35 = vector.shape_cast %34 : vector<8xf32> to vector<8x1xf32>
    %36 = vector.broadcast %35 : vector<8x1xf32> to vector<8x32xf32>
    %37 = arith.subf %33, %36 : vector<8x32xf32>
    %38 = math.exp %37 : vector<8x32xf32>
    %cst_20 = arith.constant dense<0.000000e+00> : vector<8xf32>
    %39 = vector.multi_reduction <add>, %38, %cst_20 [1] : vector<8x32xf32> to vector<8xf32>
    %40 = vector.shape_cast %39 : vector<8xf32> to vector<8x1xf32>
    %41 = tpu.reciprocal %40 {approx = true} : vector<8x1xf32> -> vector<8x1xf32>
    %42 = vector.broadcast %41 : vector<8x1xf32> to vector<8x32xf32>
    %43 = arith.mulf %38, %42 : vector<8x32xf32>
    %cst_21 = arith.constant dense<0.000000e+00> : vector<8x168xf32>
    %44 = tpu.matmul %43, %5, %cst_21 {dimension_numbers = #tpu.dot_dimension_numbers<[1], [0], [0], [1], [0, 0, 1, 1], [], []>} : vector<8x32xf32>, vector<32x168xf32>, vector<8x168xf32> -> vector<8x168xf32>
    %cst_22 = arith.constant dense<0.000000e+00> : vector<8xf32>
    %45 = vector.multi_reduction <add>, %44, %cst_22 [1] : vector<8x168xf32> to vector<8xf32>
    %46 = vector.shape_cast %45 : vector<8xf32> to vector<8x1xf32>
    %cst_23 = arith.constant 1.680000e+02 : f32
    %47 = vector.broadcast %cst_23 : f32 to vector<8x1xf32>
    %48 = arith.divf %46, %47 : vector<8x1xf32>
    %49 = vector.broadcast %48 : vector<8x1xf32> to vector<8x168xf32>
    %50 = arith.subf %44, %49 : vector<8x168xf32>
    %51 = arith.mulf %50, %50 : vector<8x168xf32>
    %cst_24 = arith.constant dense<0.000000e+00> : vector<8xf32>
    %52 = vector.multi_reduction <add>, %51, %cst_24 [1] : vector<8x168xf32> to vector<8xf32>
    %53 = vector.shape_cast %52 : vector<8xf32> to vector<8x1xf32>
    %cst_25 = arith.constant 1.680000e+02 : f32
    %54 = vector.broadcast %cst_25 : f32 to vector<8x1xf32>
    %55 = arith.divf %53, %54 : vector<8x1xf32>
    %56 = vector.broadcast %48 : vector<8x1xf32> to vector<8x168xf32>
    %57 = arith.subf %44, %56 : vector<8x168xf32>
    %cst_26 = arith.constant 9.99999974E-6 : f32
    %58 = vector.broadcast %cst_26 : f32 to vector<8x1xf32>
    %59 = arith.addf %55, %58 : vector<8x1xf32>
    %60 = math.rsqrt %59 : vector<8x1xf32>
    %61 = vector.broadcast %60 : vector<8x1xf32> to vector<8x168xf32>
    %62 = arith.mulf %57, %61 : vector<8x168xf32>
    %63 = vector.broadcast %3 : vector<1x168xf32> to vector<8x168xf32>
    %64 = arith.mulf %62, %63 : vector<8x168xf32>
    %65 = vector.broadcast %4 : vector<1x168xf32> to vector<8x168xf32>
    %66 = arith.addf %64, %65 : vector<8x168xf32>
    %c0_27 = arith.constant 0 : index
    %c0_28 = arith.constant 0 : index
    %67 = vector.load %arg6[%c0_27, %c0_28] : memref<8x24xf32, #tpu.memory_space<vmem>>, vector<8x24xf32>
    %cst_29 = arith.constant dense<0.000000e+00> : vector<8x168xf32>
    %68 = tpu.matmul %67, %6, %cst_29 {dimension_numbers = #tpu.dot_dimension_numbers<[1], [0], [0], [1], [0, 0, 1, 1], [], []>} : vector<8x24xf32>, vector<24x168xf32>, vector<8x168xf32> -> vector<8x168xf32>
    %69 = arith.addf %66, %68 : vector<8x168xf32>
    %cst_30 = arith.constant 5.000000e-01 : f32
    %70 = vector.broadcast %cst_30 : f32 to vector<8x168xf32>
    %71 = arith.mulf %70, %69 : vector<8x168xf32>
    %cst_31 = arith.constant 0.707106769 : f32
    %72 = vector.broadcast %cst_31 : f32 to vector<8x168xf32>
    %73 = arith.mulf %69, %72 : vector<8x168xf32>
    %74 = math.erf %73 : vector<8x168xf32>
    %cst_32 = arith.constant 1.000000e+00 : f32
    %75 = vector.broadcast %cst_32 : f32 to vector<8x168xf32>
    %76 = arith.addf %75, %74 : vector<8x168xf32>
    %77 = arith.mulf %71, %76 : vector<8x168xf32>
    %c0_33 = arith.constant 0 : index
    %c0_34 = arith.constant 0 : index
    %78 = vector.load %arg7[%c0_33, %c0_34] : memref<8x168xf32, #tpu.memory_space<vmem>>, vector<8x168xf32>
    tpu.vector_store %arg7[%c0_33, %c0_34], %77 {strides = array<i32>} : memref<8x168xf32, #tpu.memory_space<vmem>>, vector<8x168xf32>,
    return
  }
  func.func @transform_0(%arg0: i32) -> (i32, i32) {
    %c0_i32 = arith.constant 0 : i32
    %c0_i32_0 = arith.constant 0 : i32
    return %arg0, %c0_i32 : i32, i32
  }
  func.func @transform_1(%arg0: i32) -> (i32, i32) {
    %c0_i32 = arith.constant 0 : i32
    %c0_i32_0 = arith.constant 0 : i32
    %c0_i32_1 = arith.constant 0 : i32
    return %c0_i32, %c0_i32_0 : i32, i32
  }
  func.func @transform_2(%arg0: i32) -> (i32, i32) {
    %c0_i32 = arith.constant 0 : i32
    %c0_i32_0 = arith.constant 0 : i32
    %c0_i32_1 = arith.constant 0 : i32
    return %c0_i32, %c0_i32_0 : i32, i32
  }
  func.func @transform_3(%arg0: i32) -> (i32, i32) {
    %c0_i32 = arith.constant 0 : i32
    %c0_i32_0 = arith.constant 0 : i32
    %c0_i32_1 = arith.constant 0 : i32
    return %c0_i32, %c0_i32_0 : i32, i32
  }
  func.func @transform_4(%arg0: i32) -> (i32, i32) {
    %c0_i32 = arith.constant 0 : i32
    %c0_i32_0 = arith.constant 0 : i32
    %c0_i32_1 = arith.constant 0 : i32
    return %c0_i32, %c0_i32_0 : i32, i32
  }
  func.func @transform_5(%arg0: i32) -> (i32, i32) {
    %c0_i32 = arith.constant 0 : i32
    %c0_i32_0 = arith.constant 0 : i32
    return %arg0, %c0_i32 : i32, i32
  }
  func.func @transform_6(%arg0: i32) -> (i32, i32) {
    %c0_i32 = arith.constant 0 : i32
    %c0_i32_0 = arith.constant 0 : i32
    return %arg0, %c0_i32 : i32, i32
  }
}

</mosaic_0001>

<llo_original>
// kernel: generator_forward.1
$region0: #{generator_forward.1}
  #allocation0 [shape = 'u32[]', space=smem, size = 0x4, offset = 0x4, fixed_abs, tag = 'smem constant byte address 0x4 - core index']
  #allocation1 [shape = 'u32[72,128]{1,0:T(1,128)}', space=vmem, size = 0x9000, scoped, tag = 'internal scratch']
  %s0 = inlined_call_operand.vmem [shape: f32[8,320], index: 0, kind: input, shape index: {}]
  %s1 = inlined_call_operand.vmem [shape: f32[320,32], index: 1, kind: input, shape index: {}]
  %s2 = inlined_call_operand.vmem [shape: f32[3,32], index: 2, kind: input, shape index: {}]
  %s3 = inlined_call_operand.vmem [shape: f32[56,168], index: 3, kind: input, shape index: {}]
  %s4 = inlined_call_operand.vmem [shape: f32[2,168], index: 4, kind: input, shape index: {}]
  %s5 = inlined_call_operand.vmem [shape: f32[8,24], index: 5, kind: input, shape index: {}]
  %s6 = inlined_call_operand.vmem [shape: f32[8,168], index: 6, kind: output, shape index: {}]
  %s7 = sld [smem:[#allocation0]]
  $region34: #{generator_forward.1} parent=0
    _
  %s9 = ssub.s32 1, %s7
  %s10 = scalar_select 0, %s9, %s7
  // Predicated region
  $region2: #{generator_forward.1} parent=0 // pred_check
    _
  $region3: #{generator_forward.1} parent=0 // pred_check_branch
    %12 = sbr.rel (0) target = $region5
  $region4: #{generator_forward.1} parent=0 // pred_region
    _
  $region5: #{generator_forward.1} parent=0 // pred_fallthru
    _
  // Predicated region
  $region6: #{generator_forward.1} parent=0 // pred_check
    _
  $region7: #{generator_forward.1} parent=0 // pred_check_branch
    %14 = sbr.rel (0) target = $region9
  $region8: #{generator_forward.1} parent=0 // pred_region
    _
  $region9: #{generator_forward.1} parent=0 // pred_fallthru
    _
  // Predicated region
  $region10: #{generator_forward.1} parent=0 // pred_check
    _
  $region11: #{generator_forward.1} parent=0 // pred_check_branch
    %16 = sbr.rel (0) target = $region13
  $region12: #{generator_forward.1} parent=0 // pred_region
    _
  $region13: #{generator_forward.1} parent=0 // pred_fallthru
    _
  // Predicated region
  $region14: #{generator_forward.1} parent=0 // pred_check
    _
  $region15: #{generator_forward.1} parent=0 // pred_check_branch
    %18 = sbr.rel (0) target = $region17
  $region16: #{generator_forward.1} parent=0 // pred_region
    _
  $region17: #{generator_forward.1} parent=0 // pred_fallthru
    _
  // Predicated region
  $region18: #{generator_forward.1} parent=0 // pred_check
    _
  $region19: #{generator_forward.1} parent=0 // pred_check_branch
    %20 = sbr.rel (0) target = $region21
  $region20: #{generator_forward.1} parent=0 // pred_region
    _
  $region21: #{generator_forward.1} parent=0 // pred_fallthru
    _
  // Predicated region
  $region22: #{generator_forward.1} parent=0 // pred_check
    _
  $region23: #{generator_forward.1} parent=0 // pred_check_branch
    %22 = sbr.rel (0) target = $region25
  $region24: #{generator_forward.1} parent=0 // pred_region
    _
  $region25: #{generator_forward.1} parent=0 // pred_fallthru
    _
  %v23 = vld [vmem:[%s2] sm:$0x1]
  %v24 = vld [vmem:[%s2 + $0x1] sm:$0x1]
  %v25 = vld [vmem:[%s2 + $0x2] sm:$0x1]
  %v26 = vld [vmem:[%s4] ss:$2 sm:$0x3]
  %s27 = scalar_lea.vmem %s4, 1
  %v28 = vld [vmem:[%s27] ss:$2 sm:$0x3]
  %v29 = vld [vmem:[%s3] sm:$0xff]
  %v30 = vld [vmem:[%s3 + $0x8] sm:$0xff]
  %v31 = vld [vmem:[%s3 + $0x10] sm:$0xff]
  %v32 = vld [vmem:[%s3 + $0x18] sm:$0xff]
  %v33 = vld [vmem:[%s3 + $0x20] sm:$0xff]
  %v34 = vld [vmem:[%s3 + $0x28] sm:$0xff]
  %v35 = vld [vmem:[%s3 + $0x30] sm:$0xff]
  %v36 = vld [vmem:[%s3 + $0x38] sm:$0xff]
  %v37 = vld [vmem:[%s3 + $0x40] sm:$0xff]
  %v38 = vld [vmem:[%s3 + $0x48] sm:$0xff]
  %v39 = vld [vmem:[%s3 + $0x50] sm:$0xff]
  %v40 = vld [vmem:[%s3 + $0x58] sm:$0xff]
  %v41 = vld [vmem:[%s3 + $0x60] sm:$0xff]
  %v42 = vld [vmem:[%s3 + $0x68] sm:$0xff]
  %v43 = vld [vmem:[%s0] sm:$0xff]
  %v44 = vld [vmem:[%s0 + $0x8] sm:$0xff]
  %v45 = vld [vmem:[%s0 + $0x10] sm:$0xff]
  %v46 = vld [vmem:[%s1] sm:$0xff]
  %v47 = vld [vmem:[%s1 + $0x8] sm:$0xff]
  %v48 = vld [vmem:[%s1 + $0x10] sm:$0xff]
  %v49 = vld [vmem:[%s1 + $0x18] sm:$0xff]
  %v50 = vld [vmem:[%s1 + $0x20] sm:$0xff]
  %v51 = vld [vmem:[%s1 + $0x28] sm:$0xff]
  %v52 = vld [vmem:[%s1 + $0x30] sm:$0xff]
  %v53 = vld [vmem:[%s1 + $0x38] sm:$0xff]
  %v54 = vld [vmem:[%s1 + $0x40] sm:$0xff]
  %v55 = vld [vmem:[%s1 + $0x48] sm:$0xff]
  %v56 = vld [vmem:[%s1 + $0x50] sm:$0xff]
  %v57 = vld [vmem:[%s1 + $0x58] sm:$0xff]
  %v58 = vld [vmem:[%s1 + $0x60] sm:$0xff]
  %v59 = vld [vmem:[%s1 + $0x68] sm:$0xff]
  %v60 = vld [vmem:[%s1 + $0x70] sm:$0xff]
  %v61 = vld [vmem:[%s1 + $0x78] sm:$0xff]
  %v62 = vld [vmem:[%s1 + $0x80] sm:$0xff]
  %v63 = vld [vmem:[%s1 + $0x88] sm:$0xff]
  %v64 = vld [vmem:[%s1 + $0x90] sm:$0xff]
  %v65 = vld [vmem:[%s1 + $0x98] sm:$0xff]
  %v66 = vld [vmem:[%s1 + $0xa0] sm:$0xff]
  %v67 = vld [vmem:[%s1 + $0xa8] sm:$0xff]
  %v68 = vld [vmem:[%s1 + $0xb0] sm:$0xff]
  %v69 = vld [vmem:[%s1 + $0xb8] sm:$0xff]
  %v70 = vld [vmem:[%s1 + $0xc0] sm:$0xff]
  %v71 = vld [vmem:[%s1 + $0xc8] sm:$0xff]
  %v72 = vld [vmem:[%s1 + $0xd0] sm:$0xff]
  %v73 = vld [vmem:[%s1 + $0xd8] sm:$0xff]
  %v74 = vld [vmem:[%s1 + $0xe0] sm:$0xff]
  %v75 = vld [vmem:[%s1 + $0xe8] sm:$0xff]
  %v76 = vld [vmem:[%s1 + $0xf0] sm:$0xff]
  %v77 = vld [vmem:[%s1 + $0xf8] sm:$0xff]
  %v78 = vld [vmem:[%s1 + $0x100] sm:$0xff]
  %v79 = vld [vmem:[%s1 + $0x108] sm:$0xff]
  %v80 = vld [vmem:[%s1 + $0x110] sm:$0xff]
  %v81 = vld [vmem:[%s1 + $0x118] sm:$0xff]
  %v82 = vld [vmem:[%s1 + $0x120] sm:$0xff]
  %v83 = vld [vmem:[%s1 + $0x128] sm:$0xff]
  %v84 = vld [vmem:[%s1 + $0x130] sm:$0xff]
  %v85 = vld [vmem:[%s1 + $0x138] sm:$0xff]
  %v86 = vperm.slane %v23, 0
  %vm87 = vcmask 523264
  %v89 = vsel %vm87, %v45, 0
  %91 = vmatpush.msra.mxu0 %v61
  %92 = vmatpush.msra.mxu0 %v60
  %93 = vmatpush.msra.mxu0 %v59
  %94 = vmatpush.msra.mxu0 %v58
  %95 = vmatpush.msra.mxu0 %v57
  %96 = vmatpush.msra.mxu0 %v56
  %97 = vmatpush.msra.mxu0 %v55
  %98 = vmatpush.msra.mxu0 %v54
  %99 = vmatpush.msra.mxu0 %v53
  %100 = vmatpush.msra.mxu0 %v52
  %101 = vmatpush.msra.mxu0 %v51
  %102 = vmatpush.msra.mxu0 %v50
  %103 = vmatpush.msra.mxu0 %v49
  %104 = vmatpush.msra.mxu0 %v48
  %105 = vmatpush.msra.mxu0 %v47
  %106 = vmatpush.msra.mxu0 %v46
  %107 = vmatmul.f32.gmra.mxu0 %v43
  %v108 = vpop.f32.mrf.mxu0
  %v109 = vadd.f32 %v86, %v108
  %110 = vdwg.mxu0
  %111 = vmatpush.msra.mxu0 %v77
  %112 = vmatpush.msra.mxu0 %v76
  %113 = vmatpush.msra.mxu0 %v75
  %114 = vmatpush.msra.mxu0 %v74
  %115 = vmatpush.msra.mxu0 %v73
  %116 = vmatpush.msra.mxu0 %v72
  %117 = vmatpush.msra.mxu0 %v71
  %118 = vmatpush.msra.mxu0 %v70
  %119 = vmatpush.msra.mxu0 %v69
  %120 = vmatpush.msra.mxu0 %v68
  %121 = vmatpush.msra.mxu0 %v67
  %122 = vmatpush.msra.mxu0 %v66
  %123 = vmatpush.msra.mxu0 %v65
  %124 = vmatpush.msra.mxu0 %v64
  %125 = vmatpush.msra.mxu0 %v63
  %126 = vmatpush.msra.mxu0 %v62
  %127 = vmatmul.f32.gmra.mxu0 %v44
  %v128 = vpop.f32.mrf.mxu0
  %v129 = vadd.f32 %v109, %v128
  %130 = vdwg.mxu0
  %131 = vmatpush.msra.mxu0 0.0
  %132 = vmatpush.msra.mxu0 0.0
  %133 = vmatpush.msra.mxu0 0.0
  %134 = vmatpush.msra.mxu0 0.0
  %135 = vmatpush.msra.mxu0 0.0
  %136 = vmatpush.msra.mxu0 0.0
  %137 = vmatpush.msra.mxu0 0.0
  %138 = vmatpush.msra.mxu0 0.0
  %139 = vmatpush.msra.mxu0 %v85
  %140 = vmatpush.msra.mxu0 %v84
  %141 = vmatpush.msra.mxu0 %v83
  %142 = vmatpush.msra.mxu0 %v82
  %143 = vmatpush.msra.mxu0 %v81
  %144 = vmatpush.msra.mxu0 %v80
  %145 = vmatpush.msra.mxu0 %v79
  %146 = vmatpush.msra.mxu0 %v78
  %147 = vmatmul.f32.gmra.mxu0 %v89
  %v148 = vpop.f32.mrf.mxu0
  %v149 = vadd.f32 %v129, %v148
  %150 = vdwg.mxu0
  %vm151 = vcmask 261120
  %v152 = vsel %vm151, %v149, 0.0
  %153 = vadd.xlane.f32.xlu0 %v152
  %v154 = vpop.xlane.xlu0 %153
  %v155 = vrcp.pop 32.0
  %v156 = vmul.f32 32.0, %v155
  %v157 = vsub.f32 1.0, %v156
  %v158 = vmul.f32 %v155, %v157
  %v159 = vadd.f32 %v155, %v158
  %vm160 = vweird.f32 %v155
  %v161 = vsel %vm160, %v155, %v159
  %v162 = vmul.f32 %v154, %v161
  %v163 = vsub.f32 %v149, %v162
  %v164 = vmul.f32 %v163, %v163
  %v165 = vsel %vm151, %v164, 0.0
  %166 = vadd.xlane.f32.xlu0 %v165
  %v167 = vpop.xlane.xlu0 %166
  %v168 = vmul.f32 %v167, %v161
  %v169 = vadd.f32 %v168, 1e-05
  %v170 = vrsqrt.pop %v169
  %v171 = vmul.f32 %v170, %v169
  %v172 = vmul.f32 %v171, %v170
  %v173 = vmul.f32 0.5, %v172
  %v174 = vsub.f32 1.5, %v173
  %v175 = vmul.f32 %v170, %v174
  %vm176 = vweird.f32 %v169
  %vm177 = vweird.f32 %v170
  %vm178 = vmor %vm176, %vm177
  %v179 = vsel %vm178, %v170, %v175
  %v180 = vmul.f32 %v163, %v179
  %v181 = vperm.slane %v24, 0
  %v182 = vmul.f32 %v180, %v181
  %v183 = vperm.slane %v25, 0
  %v184 = vadd.f32 %v182, %v183
  %v185 = vsel %vm151, %v184, -inf
  %186 = vmax.xlane.f32.xlu0 %v185
  %v187 = vpop.xlane.xlu0 %186
  %v188 = vsub.f32 %v184, %v187
  %v189 = vmul.f32 %v188, 1.442695
  %v190 = vpow.pop %v189
  %v191 = vsel %vm151, %v190, 0.0
  %192 = vadd.xlane.f32.xlu0 %v191
  %v193 = vpop.xlane.xlu0 %192
  %v194 = vrcp.pop %v193
  %v195 = vmul.f32 %v190, %v194
  %v197 = vsel %vm151, %v195, 0
  %199 = vmatpush.msra.mxu0 0.0
  %200 = vmatpush.msra.mxu0 0.0
  %201 = vmatpush.msra.mxu0 0.0
  %202 = vmatpush.msra.mxu0 0.0
  %203 = vmatpush.msra.mxu0 0.0
  %204 = vmatpush.msra.mxu0 0.0
  %205 = vmatpush.msra.mxu0 0.0
  %206 = vmatpush.msra.mxu0 0.0
  %207 = vmatpush.msra.mxu0 0.0
  %208 = vmatpush.msra.mxu0 0.0
  %209 = vmatpush.msra.mxu0 0.0
  %210 = vmatpush.msra.mxu0 0.0
  %211 = vmatpush.msra.mxu0 %v35
  %212 = vmatpush.msra.mxu0 %v33
  %213 = vmatpush.msra.mxu0 %v31
  %214 = vmatpush.msra.mxu0 %v29
  %215 = vmatmul.f32.gmra.mxu0 %v197
  %v216 = vpop.f32.mrf.mxu0
  %v217 = vadd.f32 0.0, %v216
  %218 = vdwg.mxu0
  %219 = vmatpush.msra.mxu0 0.0
  %220 = vmatpush.msra.mxu0 0.0
  %221 = vmatpush.msra.mxu0 0.0
  %222 = vmatpush.msra.mxu0 0.0
  %223 = vmatpush.msra.mxu0 0.0
  %224 = vmatpush.msra.mxu0 0.0
  %225 = vmatpush.msra.mxu0 0.0
  %226 = vmatpush.msra.mxu0 0.0
  %227 = vmatpush.msra.mxu0 0.0
  %228 = vmatpush.msra.mxu0 0.0
  %229 = vmatpush.msra.mxu0 0.0
  %230 = vmatpush.msra.mxu0 0.0
  %231 = vmatpush.msra.mxu0 %v36
  %232 = vmatpush.msra.mxu0 %v34
  %233 = vmatpush.msra.mxu0 %v32
  %234 = vmatpush.msra.mxu0 %v30
  %235 = vmatmul.f32.gmra.mxu0 %v197
  %v236 = vpop.f32.mrf.mxu0
  %v237 = vadd.f32 0.0, %v236
  %238 = vdwg.mxu0
  %vm239 = vcmask 326656
  %v240 = vsel %vm239, %v237, 0.0
  %v241 = vadd.f32 %v217, %v240
  %242 = vadd.xlane.f32.xlu0 %v241
  %v243 = vpop.xlane.xlu0 %242
  %v244 = vrcp.pop 168.0
  %v245 = vmul.f32 168.0, %v244
  %v246 = vsub.f32 1.0, %v245
  %v247 = vmul.f32 %v244, %v246
  %v248 = vadd.f32 %v244, %v247
  %vm249 = vweird.f32 %v244
  %v250 = vsel %vm249, %v244, %v248
  %v251 = vmul.f32 %v243, %v250
  %v252 = vsub.f32 %v217, %v251
  %v253 = vsub.f32 %v237, %v251
  %v254 = vmul.f32 %v252, %v252
  %v255 = vmul.f32 %v253, %v253
  %v256 = vsel %vm239, %v255, 0.0
  %v257 = vadd.f32 %v254, %v256
  %258 = vadd.xlane.f32.xlu0 %v257
  %v259 = vpop.xlane.xlu0 %258
  %v260 = vmul.f32 %v259, %v250
  %v261 = vadd.f32 %v260, 1e-05
  %v262 = vrsqrt.pop %v261
  %v263 = vmul.f32 %v262, %v261
  %v264 = vmul.f32 %v263, %v262
  %v265 = vmul.f32 0.5, %v264
  %v266 = vsub.f32 1.5, %v265
  %v267 = vmul.f32 %v262, %v266
  %vm268 = vweird.f32 %v261
  %vm269 = vweird.f32 %v262
  %vm270 = vmor %vm268, %vm269
  %v271 = vsel %vm270, %v262, %v267
  %v272 = vmul.f32 %v252, %v271
  %v273 = vmul.f32 %v253, %v271
  %v275 = vperm.slane %v26, 0
  %v276 = vperm.slane %v26, 1
  %v279 = vmul.f32 %v272, %v275
  %v280 = vmul.f32 %v273, %v276
  %v282 = vperm.slane %v28, 0
  %v283 = vperm.slane %v28, 1
  %v286 = vadd.f32 %v279, %v282
  %v287 = vadd.f32 %v280, %v283
  %v288 = vld [vmem:[%s5] sm:$0xff]
  %vm289 = vcmask 195584
  %v291 = vsel %vm289, %v288, 0
  %293 = vmatpush.msra.mxu0 0.0
  %294 = vmatpush.msra.mxu0 0.0
  %295 = vmatpush.msra.mxu0 0.0
  %296 = vmatpush.msra.mxu0 0.0
  %297 = vmatpush.msra.mxu0 0.0
  %298 = vmatpush.msra.mxu0 0.0
  %299 = vmatpush.msra.mxu0 0.0
  %300 = vmatpush.msra.mxu0 0.0
  %301 = vmatpush.msra.mxu0 0.0
  %302 = vmatpush.msra.mxu0 0.0
  %303 = vmatpush.msra.mxu0 0.0
  %304 = vmatpush.msra.mxu0 0.0
  %305 = vmatpush.msra.mxu0 0.0
  %306 = vmatpush.msra.mxu0 %v41
  %307 = vmatpush.msra.mxu0 %v39
  %308 = vmatpush.msra.mxu0 %v37
  %309 = vmatmul.f32.gmra.mxu0 %v291
  %v310 = vpop.f32.mrf.mxu0
  %v311 = vadd.f32 0.0, %v310
  %312 = vdwg.mxu0
  %313 = vmatpush.msra.mxu0 0.0
  %314 = vmatpush.msra.mxu0 0.0
  %315 = vmatpush.msra.mxu0 0.0
  %316 = vmatpush.msra.mxu0 0.0
  %317 = vmatpush.msra.mxu0 0.0
  %318 = vmatpush.msra.mxu0 0.0
  %319 = vmatpush.msra.mxu0 0.0
  %320 = vmatpush.msra.mxu0 0.0
  %321 = vmatpush.msra.mxu0 0.0
  %322 = vmatpush.msra.mxu0 0.0
  %323 = vmatpush.msra.mxu0 0.0
  %324 = vmatpush.msra.mxu0 0.0
  %325 = vmatpush.msra.mxu0 0.0
  %326 = vmatpush.msra.mxu0 %v42
  %327 = vmatpush.msra.mxu0 %v40
  %328 = vmatpush.msra.mxu0 %v38
  %329 = vmatmul.f32.gmra.mxu0 %v291
  %v330 = vpop.f32.mrf.mxu0
  %v331 = vadd.f32 0.0, %v330
  %332 = vdwg.mxu0
  %v333 = vadd.f32 %v286, %v311
  %v334 = vadd.f32 %v287, %v331
  %v335 = vmul.f32 %v333, 0.5
  %v336 = vmul.f32 %v334, 0.5
  %v337 = vmul.f32 %v333, 0.70710677
  %v338 = vmul.f32 %v334, 0.70710677
  %v339 = vmul.f32 %v337, %v337
  %v340 = vmin.f32 16.0, %v339
  %v341 = vmul.f32 %v340, 2.1237322e-06
  %v342 = vadd.f32 %v341, 0.00028619796
  %v343 = vmul.f32 %v340, %v342
  %v344 = vadd.f32 %v343, 0.0036580483
  %v345 = vmul.f32 %v340, %v344
  %v346 = vadd.f32 %v345, 0.05243302
  %v347 = vmul.f32 %v340, %v346
  %v348 = vadd.f32 %v347, 0.18741608
  %v349 = vmul.f32 %v340, %v348
  %v350 = vadd.f32 %v349, 1.1283791
  %v351 = vmul.f32 %v337, %v350
  %v352 = vmul.f32 %v340, 3.8918573e-05
  %v353 = vadd.f32 %v352, 0.001143296
  %v354 = vmul.f32 %v340, %v353
  %v355 = vadd.f32 %v354, 0.014752088
  %v356 = vmul.f32 %v340, %v355
  %v357 = vadd.f32 %v356, 0.112945676
  %v358 = vmul.f32 %v340, %v357
  %v359 = vadd.f32 %v358, 0.4994258
  %v360 = vmul.f32 %v340, %v359
  %v361 = vadd.f32 %v360, 1.0
  %v362 = vrcp.pop %v361
  %v363 = vmul.f32 %v361, %v362
  %v364 = vsub.f32 1.0, %v363
  %v365 = vmul.f32 %v362, %v364
  %v366 = vadd.f32 %v362, %v365
  %vm367 = vweird.f32 %v361
  %vm368 = vweird.f32 %v362
  %vm369 = vmor %vm367, %vm368
  %v370 = vsel %vm369, %v362, %v366
  %v371 = vand.u32 2147483647, %v361
  %vm372 = vcmp.eq.f32.partialorder %v371, 8.507059e+37
  %v373 = vand.u32 %v361, 2147483648
  %v374 = vor.u32 1.1754944e-38, %v373
  %v375 = vsel %vm372, %v374, %v370
  %v376 = vmul.f32 %v351, %v375
  %v377 = vmin.f32 %v376, 1.0
  %v378 = vmax.f32 %v377, -1.0
  %v379 = vmul.f32 %v338, %v338
  %v380 = vmin.f32 16.0, %v379
  %v381 = vmul.f32 %v380, 2.1237322e-06
  %v382 = vadd.f32 %v381, 0.00028619796
  %v383 = vmul.f32 %v380, %v382
  %v384 = vadd.f32 %v383, 0.0036580483
  %v385 = vmul.f32 %v380, %v384
  %v386 = vadd.f32 %v385, 0.05243302
  %v387 = vmul.f32 %v380, %v386
  %v388 = vadd.f32 %v387, 0.18741608
  %v389 = vmul.f32 %v380, %v388
  %v390 = vadd.f32 %v389, 1.1283791
  %v391 = vmul.f32 %v338, %v390
  %v392 = vmul.f32 %v380, 3.8918573e-05
  %v393 = vadd.f32 %v392, 0.001143296
  %v394 = vmul.f32 %v380, %v393
  %v395 = vadd.f32 %v394, 0.014752088
  %v396 = vmul.f32 %v380, %v395
  %v397 = vadd.f32 %v396, 0.112945676
  %v398 = vmul.f32 %v380, %v397
  %v399 = vadd.f32 %v398, 0.4994258
  %v400 = vmul.f32 %v380, %v399
  %v401 = vadd.f32 %v400, 1.0
  %v402 = vrcp.pop %v401
  %v403 = vmul.f32 %v401, %v402
  %v404 = vsub.f32 1.0, %v403
  %v405 = vmul.f32 %v402, %v404
  %v406 = vadd.f32 %v402, %v405
  %vm407 = vweird.f32 %v401
  %vm408 = vweird.f32 %v402
  %vm409 = vmor %vm407, %vm408
  %v410 = vsel %vm409, %v402, %v406
  %v411 = vand.u32 2147483647, %v401
  %vm412 = vcmp.eq.f32.partialorder %v411, 8.507059e+37
  %v413 = vand.u32 %v401, 2147483648
  %v414 = vor.u32 1.1754944e-38, %v413
  %v415 = vsel %vm412, %v414, %v410
  %v416 = vmul.f32 %v391, %v415
  %v417 = vmin.f32 %v416, 1.0
  %v418 = vmax.f32 %v417, -1.0
  %v419 = vadd.f32 %v378, 1.0
  %v420 = vadd.f32 %v418, 1.0
  %v421 = vmul.f32 %v335, %v419
  %v422 = vmul.f32 %v336, %v420
  %423 = vst [vmem:[%s6] sm:$0xff] %v421
  %424 = vst.msk [vmem:[%s6 + $0x8] sm:$0xff] %vm239, %v422
  // Predicated region
  $region26: #{generator_forward.1} parent=0 // pred_check
    _
  $region27: #{generator_forward.1} parent=0 // pred_check_branch
    %426 = sbr.rel (0) target = $region29
  $region28: #{generator_forward.1} parent=0 // pred_region
    _
  $region29: #{generator_forward.1} parent=0 // pred_fallthru
    _
  // Predicated region
  $region30: #{generator_forward.1} parent=0 // pred_check
    _
  $region31: #{generator_forward.1} parent=0 // pred_check_branch
    %428 = sbr.rel (0) target = $region33
  $region32: #{generator_forward.1} parent=0 // pred_region
    _
  $region33: #{generator_forward.1} parent=0 // pred_fallthru
    _

</llo_original>
